<compile_context>
chip_gen: v5e
topology: v5e:2x2
jax: 0.10.0
libtpu: 0.0.40
codegen_flags: <defaults>
</compile_context>

<pallas_src>
import jax
import jax.numpy as jnp
from jax.experimental import pallas as pl
from jax.experimental.pallas import tpu as pltpu


def _round_up(x, m):
    return (x + m - 1) // m * m


def _divisor_block(total8, target):
    """Largest multiple-of-8 divisor of `total8` (a multiple of 8) <= target."""
    n = total8 // 8
    d = max(1, min(target, total8) // 8)
    while n % d:
        d -= 1
    return 8 * d


# --------------------------------------------------------------------------- #
# AttentionLayer kernel: Linear(E,1) -> softmax over seq -> weighted sum
# --------------------------------------------------------------------------- #
def _attention_kernel(x_ref, w_ref, o_ref):
    # x_ref: (bb, T, E) native dtype   w_ref: (1, E) same dtype   o_ref: (bb, E)
    x = x_ref[...]
    w = w_ref[...]

    # scores[b, t] = <x[b, t, :], w> — native-dtype VPU multiply, f32 lane
    # reduce over E.  Bias is dropped: softmax(s + b) == softmax(s).
    scores = jnp.sum(x * w[None, :, :], axis=-1, dtype=jnp.float32)       # (bb, T)

    # Softmax over the sequence axis (exact normalization; kernel is HBM-bound
    # so the divide costs nothing on the EUP).
    m = jnp.max(scores, axis=-1, keepdims=True)
    e = jnp.exp(scores - m)
    weights = e / jnp.sum(e, axis=-1, keepdims=True)                       # (bb, T)

    # context[b, :] = sum_t weights[b, t] * x[b, t, :] — VPU multiply + sublane
    # reduce over T (an M=1 matmul would underfill the MXU and serialize).
    wx = weights.astype(x.dtype)[:, :, None] * x                           # (bb, T, E)
    o_ref[...] = jnp.sum(wx, axis=1, dtype=jnp.float32).astype(o_ref.dtype)


def attention_layer(x, w, b=None, *, block_b=None):
    """x: (B, T, E); w: (E, 1); b: (1,) (ignored — softmax-invariant). -> (B, E)."""
    B, T, E = x.shape
    dtype = x.dtype
    del b  # softmax(x @ w + b) == softmax(x @ w); bias is a mathematical no-op.

    itemsize = jnp.dtype(dtype).itemsize
    try:
        info = pltpu.get_tpu_info()
        vmem_cap = int(getattr(info, "vmem_capacity_bytes", 64 << 20))
    except Exception:  # pragma: no cover — conservative fallback
        vmem_cap = 64 << 20
    # ~64 MiB scoped on v5e/v6e (128 MiB physical), ~32 MiB on v7x (64 MiB).
    vmem_limit = int(min(max(vmem_cap // 2, 32 << 20), 96 << 20))
    budget = int(vmem_limit * 0.6)

    def per_row_bytes(nbuf):
        return (nbuf * T * E * itemsize      # pipelined x tile buffers
                + 8 * T * E                  # f32 compute intermediates (2x (T,E))
                + 32 * T                     # (T,) f32 score/exp/weight temporaries
                + 2 * E * itemsize)          # double-buffered output tile

    # Pad the batch only to a multiple of 8 (sublane rule for the (bb, E) output).
    Bp8 = _round_up(B, 8)
    if block_b is None:
        bb_target = min(max(8, budget // per_row_bytes(2)), 1024, Bp8)
    else:
        bb_target = min(max(8, (block_b // 8) * 8), Bp8)
    # Keep >=4 grid steps when the batch allows (2 per TensorCore on v7x; extra
    # steps also improve DMA/compute overlap on v5e/v6e), else >=2.
    if Bp8 >= 32:
        bb_target = min(bb_target, max(8, Bp8 // 4))
    elif Bp8 >= 16:
        bb_target = min(bb_target, max(8, Bp8 // 2))
    # bb divides the (8-padded) batch, so no full-tensor pad copy for alignment.
    bb = _divisor_block(Bp8, bb_target)
    num_steps = Bp8 // bb

    if Bp8 != B:
        x = jnp.pad(x, ((0, Bp8 - B), (0, 0), (0, 0)))
    w_row = w.reshape(1, E).astype(dtype)

    # Optional 3-deep input buffering: hides DMA jitter behind the short compute
    # phase when there is VMEM headroom and enough grid steps to pipeline.
    x_spec_kwargs = {}
    if num_steps >= 3 and bb * per_row_bytes(3) <= budget:
        x_spec_kwargs = dict(pipeline_mode=pl.Buffered(3))
    x_spec = pl.BlockSpec((bb, T, E), lambda i: (i, 0, 0), **x_spec_kwargs)

    # TODO(synk): for very long T, add an "arbitrary" T grid axis with an
    # online-softmax accumulator so a single (bb, T, E) tile never exceeds VMEM.
    out = pl.pallas_call(
        _attention_kernel,
        out_shape=jax.ShapeDtypeStruct((Bp8, E), dtype),
        grid_spec=pltpu.PrefetchScalarGridSpec(
            num_scalar_prefetch=0,
            grid=(num_steps,),
            in_specs=[
                x_spec,                                       # (bb, T, E), unpadded E
                pl.BlockSpec((1, E), lambda i: (0, 0)),       # attention weight row
            ],
            out_specs=pl.BlockSpec((bb, E), lambda i: (i, 0)),
        ),
        compiler_params=pltpu.CompilerParams(
            dimension_semantics=("parallel",),
            vmem_limit_bytes=vmem_limit,
        ),
    )(x, w_row)
    return out[:B]


def attention_layer_ref(x, w, b):
    scores = jnp.einsum("bte,eo->bto", x, w) + b
    weights = jax.nn.softmax(scores, axis=1)
    return jnp.sum(weights * x, axis=1)


# --------------------------------------------------------------------------- #
# Joint head kernel: cat([user_emb, cand_emb]) -> Linear -> ReLU -> Linear(4)
# --------------------------------------------------------------------------- #
def _joint_head_kernel(x_ref, w1_ref, b1_ref, w2_ref, b2_ref, o_ref):
    # x: (bb, Du+Dc)  w1: (Du+Dc, H)  b1: (1, H) f32  w2: (H, Opad)  b2: (1, Opad) f32
    x = x_ref[...]
    h = jnp.dot(x, w1_ref[...], preferred_element_type=jnp.float32) + b1_ref[...]
    h = jnp.maximum(h, 0.0).astype(x.dtype)          # keep MXU operands in act dtype
    out = jnp.dot(h, w2_ref[...], preferred_element_type=jnp.float32) + b2_ref[...]
    o_ref[...] = out.astype(o_ref.dtype)


def joint_head(user_emb, cand_emb, w1, b1, w2, b2, *, block_b=512):
    B, Du = user_emb.shape
    _, Dc = cand_emb.shape
    Din, H = w1.shape
    O = w2.shape[1]
    dtype = user_emb.dtype

    # torch.cat folded in the wrapper (tiny (B, Du+Dc) tensor), so the kernel
    # runs a single K=Du+Dc MXU matmul instead of two half-K pushes.
    x = jnp.concatenate([user_emb, cand_emb.astype(dtype)], axis=1)

    # Lane-dense output: pad O (=4) to 128 so the (bb, O) store is an unmasked vst.
    O_pad = _round_up(O, 128)
    w1k = w1.astype(dtype)                       # MXU operands in activation dtype
    w2k = w2.astype(dtype)                       # (bf16 fast path when model is bf16)
    b1k = b1.reshape(1, H).astype(jnp.float32)
    b2k = b2.reshape(1, O).astype(jnp.float32)
    if O_pad != O:
        w2k = jnp.pad(w2k, ((0, 0), (0, O_pad - O)))
        b2k = jnp.pad(b2k, ((0, 0), (0, O_pad - O)))

    Bp8 = _round_up(B, 8)
    if Bp8 != B:
        x = jnp.pad(x, ((0, Bp8 - B), (0, 0)))
    bb = _divisor_block(Bp8, max(8, (min(block_b, Bp8) // 8) * 8))

    out = pl.pallas_call(
        _joint_head_kernel,
        out_shape=jax.ShapeDtypeStruct((Bp8, O_pad), dtype),
        grid_spec=pltpu.PrefetchScalarGridSpec(
            num_scalar_prefetch=0,
            grid=(Bp8 // bb,),
            in_specs=[
                pl.BlockSpec((bb, Din), lambda i: (i, 0)),
                pl.BlockSpec((Din, H), lambda i: (0, 0)),
                pl.BlockSpec((1, H), lambda i: (0, 0)),
                pl.BlockSpec((H, O_pad), lambda i: (0, 0)),
                pl.BlockSpec((1, O_pad), lambda i: (0, 0)),
            ],
            out_specs=pl.BlockSpec((bb, O_pad), lambda i: (i, 0)),
        ),
        compiler_params=pltpu.CompilerParams(dimension_semantics=("parallel",)),
    )(x, w1k, b1k, w2k, b2k)
    return out[:B, :O]


def joint_head_ref(u, c, w1, b1, w2, b2):
    j = jnp.concatenate([u, c], axis=1)
    h = jax.nn.relu(j @ w1 + b1)
    return h @ w2 + b2


if __name__ == "__main__":
    key = jax.random.PRNGKey(0)
    k1, k2, k3, k4, k5, k6, k7, k8, k9 = jax.random.split(key, 9)

    # ---- AttentionLayer (sequence pooling inside the candidate tower) ----
    B, T, E = 2, 8, 32
    x = jax.random.normal(k1, (B, T, E), dtype=jnp.float32)
    w_attn = jax.random.normal(k2, (E, 1), dtype=jnp.float32) * (1.0 / jnp.sqrt(E))
    b_attn = jax.random.normal(k3, (1,), dtype=jnp.float32) * 0.01

    ctx = jax.block_until_ready(attention_layer(x, w_attn, b_attn))
    ctx_ref = attention_layer_ref(x, w_attn, b_attn)
    assert ctx.shape == (B, E)
    assert jnp.allclose(ctx, ctx_ref, atol=2e-3, rtol=2e-3), "attention mismatch"

    # ---- Joint head: cat -> fc_joint1 + ReLU -> fc_joint2 ----
    Du, Dc, H, O = 32, 32, 64, 4
    user_emb = jax.random.normal(k4, (B, Du), dtype=jnp.float32)
    cand_emb = jax.random.normal(k5, (B, Dc), dtype=jnp.float32)
    w1 = jax.random.normal(k6, (Du + Dc, H), dtype=jnp.float32) * (1.0 / jnp.sqrt(Du + Dc))
    b1 = jax.random.normal(k7, (H,), dtype=jnp.float32) * 0.01
    w2 = jax.random.normal(k8, (H, O), dtype=jnp.float32) * (1.0 / jnp.sqrt(H))
    b2 = jax.random.normal(k9, (O,), dtype=jnp.float32) * 0.01

    out = jax.block_until_ready(joint_head(user_emb, cand_emb, w1, b1, w2, b2))
    out_ref = joint_head_ref(user_emb, cand_emb, w1, b1, w2, b2)
    assert out.shape == (B, O)
    assert jnp.allclose(out, out_ref, atol=2e-3, rtol=2e-3), "joint head mismatch"

    print("KERNEL_OK")
</pallas_src>

<mosaic_0001>
module attributes {stable_mosaic.version = 11 : i64} {
  func.func @_attention_kernel(%arg0: i32, %arg1: memref<8x8x32xf32, #tpu.memory_space<vmem>>, %arg2: memref<1x32xf32, #tpu.memory_space<vmem>>, %arg3: memref<8x32xf32, #tpu.memory_space<vmem>>) attributes {dimension_semantics = [#tpu.dimension_semantics<parallel>], iteration_bounds = array<i64: 1>, scalar_prefetch = 0 : i64, scratch_operands = 0 : i64, tpu.core_type = #tpu.core_type<tc>, window_params = [{transform_indices = @transform_0, window_bounds = array<i64: 8, 8, 32>}, {pipeline_mode = #tpu.pipeline_mode<synchronous>, transform_indices = @transform_1, window_bounds = array<i64: 1, 32>}, {transform_indices = @transform_2, window_bounds = array<i64: 8, 32>}]} {
    %c0 = arith.constant 0 : index
    %c0_0 = arith.constant 0 : index
    %c0_1 = arith.constant 0 : index
    %0 = vector.load %arg1[%c0, %c0_0, %c0_1] : memref<8x8x32xf32, #tpu.memory_space<vmem>>, vector<8x8x32xf32>
    %c0_2 = arith.constant 0 : index
    %c0_3 = arith.constant 0 : index
    %1 = vector.load %arg2[%c0_2, %c0_3] : memref<1x32xf32, #tpu.memory_space<vmem>>, vector<1x32xf32>
    %2 = vector.shape_cast %1 : vector<1x32xf32> to vector<1x1x32xf32>
    %3 = vector.broadcast %2 : vector<1x1x32xf32> to vector<8x8x32xf32>
    %4 = arith.mulf %0, %3 : vector<8x8x32xf32>
    %cst = arith.constant dense<0.000000e+00> : vector<8x8xf32>
    %5 = vector.multi_reduction <add>, %4, %cst [2] : vector<8x8x32xf32> to vector<8x8xf32>
    %cst_4 = arith.constant dense<0xFF800000> : vector<8xf32>
    %6 = vector.multi_reduction <maximumf>, %5, %cst_4 [1] : vector<8x8xf32> to vector<8xf32>
    %7 = vector.shape_cast %6 : vector<8xf32> to vector<8x1xf32>
    %8 = vector.broadcast %7 : vector<8x1xf32> to vector<8x8xf32>
    %9 = arith.subf %5, %8 : vector<8x8xf32>
    %10 = math.exp %9 : vector<8x8xf32>
    %cst_5 = arith.constant dense<0.000000e+00> : vector<8xf32>
    %11 = vector.multi_reduction <add>, %10, %cst_5 [1] : vector<8x8xf32> to vector<8xf32>
    %12 = vector.shape_cast %11 : vector<8xf32> to vector<8x1xf32>
    %13 = vector.broadcast %12 : vector<8x1xf32> to vector<8x8xf32>
    %14 = arith.divf %10, %13 : vector<8x8xf32>
    %15 = vector.shape_cast %14 : vector<8x8xf32> to vector<8x8x1xf32>
    %16 = vector.broadcast %15 : vector<8x8x1xf32> to vector<8x8x32xf32>
    %17 = arith.mulf %16, %0 : vector<8x8x32xf32>
    %cst_6 = arith.constant dense<0.000000e+00> : vector<8x32xf32>
    %18 = vector.multi_reduction <add>, %17, %cst_6 [1] : vector<8x8x32xf32> to vector<8x32xf32>
    %c0_7 = arith.constant 0 : index
    %c0_8 = arith.constant 0 : index
    %19 = vector.load %arg3[%c0_7, %c0_8] : memref<8x32xf32, #tpu.memory_space<vmem>>, vector<8x32xf32>
    tpu.vector_store %arg3[%c0_7, %c0_8], %18 {strides = array<i32>} : memref<8x32xf32, #tpu.memory_space<vmem>>, vector<8x32xf32>,
    return
  }
  func.func @transform_0(%arg0: i32) -> (i32, i32, i32) {
    %c0_i32 = arith.constant 0 : i32
    %c0_i32_0 = arith.constant 0 : i32
    %c0_i32_1 = arith.constant 0 : i32
    return %arg0, %c0_i32, %c0_i32_0 : i32, i32, i32
  }
  func.func @transform_1(%arg0: i32) -> (i32, i32) {
    %c0_i32 = arith.constant 0 : i32
    %c0_i32_0 = arith.constant 0 : i32
    %c0_i32_1 = arith.constant 0 : i32
    return %c0_i32, %c0_i32_0 : i32, i32
  }
  func.func @transform_2(%arg0: i32) -> (i32, i32) {
    %c0_i32 = arith.constant 0 : i32
    %c0_i32_0 = arith.constant 0 : i32
    return %arg0, %c0_i32 : i32, i32
  }
}

</mosaic_0001>

<llo_original>
// kernel: tpu_custom_call.1
$region0: #{tpu_custom_call.1}
  #allocation0 [shape = 'u32[]', space=smem, size = 0x4, offset = 0x4, fixed_abs, tag = 'smem constant byte address 0x4 - core index']
  #allocation1 [shape = 'u32[72,128]{1,0:T(1,128)}', space=vmem, size = 0x9000, scoped, tag = 'internal scratch']
  %s0 = inlined_call_operand.hbm [shape: f32[8,8,32], index: 0, kind: input, shape index: {}]
  %s1 = inlined_call_operand.hbm [shape: f32[1,32], index: 1, kind: input, shape index: {}]
  %s2 = inlined_call_operand.hbm [shape: f32[8,32], index: 2, kind: output, shape index: {}]
  %s3 = sld [smem:[#allocation0]]
  $region26: #{tpu_custom_call.1} parent=0
    _
  %s5 = ssub.s32 1, %s3
  %s6 = scalar_select 0, %s5, %s3
  $region1: #{tpu_custom_call.1} parent=0
    #allocation2 [shape = 'u8[32768]{0}', space=vmem, size = 0x8000, scoped, tag = 'input window, operand 0, single buffered']
    #allocation3 [shape = 's32[1]{0}', space=sflag, size = 0x4, scoped, tag = 'scoped memory for tpu_custom_call.1']
    #allocation4 [shape = 's32[1]{0}', space=sflag, size = 0x4, scoped, tag = 'scoped memory for tpu_custom_call.1']
    #allocation5 [shape = 'u8[512]{0}', space=vmem, size = 0x400, scoped, tag = 'input window, operand 1, single buffered']
    #allocation6 [shape = 's32[1]{0}', space=sflag, size = 0x4, scoped, tag = 'scoped memory for tpu_custom_call.1']
    #allocation7 [shape = 'u8[4096]{0}', space=vmem, size = 0x1000, scoped, tag = 'output window, operand 0, single buffered']
    %7 = vsyncpa [#allocation3], 0
    %8 = vsyncpa [#allocation6], 0
    %9 = vsyncpa [#allocation4], 0
    // Predicated region
    $region2: #{tpu_custom_call.1} parent=1 // pred_check
      _
    $region3: #{tpu_custom_call.1} parent=1 // pred_check_branch
      %11 = sbr.rel (0) target = $region5
    $region4: #{tpu_custom_call.1} parent=1 // pred_region
      %13 = vsyncadd [#allocation3], 0
      %s14 = sshll.u32 %s0, 4
      %s15 = int_to_ptr.hbm [resolvable:$true] %s14
      %s16 = sshll.u32 [#allocation2], 4
      %s17 = int_to_ptr.vmem [resolvable:$true] %s16
      %22 = dma.hbm_to_vmem [thread:$0]  %s15, 1024, %s17, [#allocation3], 128, 128, 8
    $region5: #{tpu_custom_call.1} parent=1 // pred_fallthru
      _
    // Predicated region
    $region6: #{tpu_custom_call.1} parent=1 // pred_check
      _
    $region7: #{tpu_custom_call.1} parent=1 // pred_check_branch
      %24 = sbr.rel (0) target = $region9
    $region8: #{tpu_custom_call.1} parent=1 // pred_region
      %26 = vsyncadd [#allocation6], 0
      %s28 = sshll.u32 %s1, 4
      %s29 = int_to_ptr.hbm [resolvable:$true] %s28
      %s30 = sshll.u32 [#allocation5], 4
      %s31 = int_to_ptr.vmem [resolvable:$true] %s30
      %33 = dma.hbm_to_vmem [thread:$0]  %s29, 16, %s31, [#allocation6]
    $region9: #{tpu_custom_call.1} parent=1 // pred_fallthru
      _
    // Predicated region
    $region10: #{tpu_custom_call.1} parent=1 // pred_check
      _
    $region11: #{tpu_custom_call.1} parent=1 // pred_check_branch
      %35 = sbr.rel (0) target = $region13
    $region12: #{tpu_custom_call.1} parent=1 // pred_region
      %37 = dma.done [#allocation3], 1024
    $region13: #{tpu_custom_call.1} parent=1 // pred_fallthru
      _
    // Predicated region
    $region14: #{tpu_custom_call.1} parent=1 // pred_check
      _
    $region15: #{tpu_custom_call.1} parent=1 // pred_check_branch
      %39 = sbr.rel (0) target = $region17
    $region16: #{tpu_custom_call.1} parent=1 // pred_region
      %41 = dma.done [#allocation6], 16
    $region17: #{tpu_custom_call.1} parent=1 // pred_fallthru
      _
    %v42 = vld [vmem:[#allocation2] sm:$0xff]
    %v43 = vld [vmem:[#allocation2 + $0x8] sm:$0xff]
    %v44 = vld [vmem:[#allocation2 + $0x10] sm:$0xff]
    %v45 = vld [vmem:[#allocation2 + $0x18] sm:$0xff]
    %v46 = vld [vmem:[#allocation2 + $0x20] sm:$0xff]
    %v47 = vld [vmem:[#allocation2 + $0x28] sm:$0xff]
    %v48 = vld [vmem:[#allocation2 + $0x30] sm:$0xff]
    %v49 = vld [vmem:[#allocation2 + $0x38] sm:$0xff]
    %v50 = vld [vmem:[#allocation5] sm:$0x1]
    %v52 = vperm.slane %v50, 0
    %v54 = vmul.f32 %v42, %v52
    %v55 = vmul.f32 %v43, %v52
    %v56 = vmul.f32 %v44, %v52
    %v57 = vmul.f32 %v45, %v52
    %v58 = vmul.f32 %v46, %v52
    %v59 = vmul.f32 %v47, %v52
    %v60 = vmul.f32 %v48, %v52
    %v61 = vmul.f32 %v49, %v52
    %vm62 = vcmask 261120
    %v63 = vsel %vm62, %v54, 0.0
    %64 = vadd.xlane.f32.xlu0 %v63
    %v65 = vpop.xlane.xlu0 %64
    %v66 = vsel %vm62, %v55, 0.0
    %67 = vadd.xlane.f32.xlu0 %v66
    %v68 = vpop.xlane.xlu0 %67
    %v69 = vsel %vm62, %v56, 0.0
    %70 = vadd.xlane.f32.xlu0 %v69
    %v71 = vpop.xlane.xlu0 %70
    %v72 = vsel %vm62, %v57, 0.0
    %73 = vadd.xlane.f32.xlu0 %v72
    %v74 = vpop.xlane.xlu0 %73
    %v75 = vsel %vm62, %v58, 0.0
    %76 = vadd.xlane.f32.xlu0 %v75
    %v77 = vpop.xlane.xlu0 %76
    %v78 = vsel %vm62, %v59, 0.0
    %79 = vadd.xlane.f32.xlu0 %v78
    %v80 = vpop.xlane.xlu0 %79
    %v81 = vsel %vm62, %v60, 0.0
    %82 = vadd.xlane.f32.xlu0 %v81
    %v83 = vpop.xlane.xlu0 %82
    %v84 = vsel %vm62, %v61, 0.0
    %85 = vadd.xlane.f32.xlu0 %v84
    %v86 = vpop.xlane.xlu0 %85
    %v95 = vlaneseq
    %v96 = vand.u32 %v95, 127
    %v97 = vperm.slane %v65, %v96
    %v98 = vperm.slane %v68, %v96
    %v99 = vperm.slane %v71, %v96
    %v100 = vperm.slane %v74, %v96
    %v101 = vperm.slane %v77, %v96
    %v102 = vperm.slane %v80, %v96
    %v103 = vperm.slane %v83, %v96
    %v104 = vperm.slane %v86, %v96
    %vm105 = vcmask 1041409
    %v106 = vsel %vm105, %v98, %v97
    %vm107 = vcmask 1042434
    %v108 = vsel %vm107, %v99, %v106
    %vm109 = vcmask 1043459
    %v110 = vsel %vm109, %v100, %v108
    %vm111 = vcmask 1044484
    %v112 = vsel %vm111, %v101, %v110
    %vm113 = vcmask 1045509
    %v114 = vsel %vm113, %v102, %v112
    %vm115 = vcmask 1046534
    %v116 = vsel %vm115, %v103, %v114
    %vm117 = vcmask 1047559
    %v118 = vsel %vm117, %v104, %v116
    %vm120 = vcmask 64512
    %v121 = vsel %vm120, %v118, -inf
    %122 = vmax.xlane.f32.xlu0 %v121
    %v123 = vpop.xlane.xlu0 %122
    %v125 = vperm.slane %v123, 0
    %v126 = vperm.slane %v123, 1
    %v127 = vperm.slane %v123, 2
    %v128 = vperm.slane %v123, 3
    %v129 = vperm.slane %v123, 4
    %v130 = vperm.slane %v123, 5
    %v131 = vperm.slane %v123, 6
    %v132 = vperm.slane %v123, 7
    %v141 = vsub.f32 %v65, %v125
    %v142 = vsub.f32 %v68, %v126
    %v143 = vsub.f32 %v71, %v127
    %v144 = vsub.f32 %v74, %v128
    %v145 = vsub.f32 %v77, %v129
    %v146 = vsub.f32 %v80, %v130
    %v147 = vsub.f32 %v83, %v131
    %v148 = vsub.f32 %v86, %v132
    %v149 = vmul.f32 %v141, 1.442695
    %v150 = vpow.pop %v149
    %v151 = vmul.f32 %v142, 1.442695
    %v152 = vpow.pop %v151
    %v153 = vmul.f32 %v143, 1.442695
    %v154 = vpow.pop %v153
    %v155 = vmul.f32 %v144, 1.442695
    %v156 = vpow.pop %v155
    %v157 = vmul.f32 %v145, 1.442695
    %v158 = vpow.pop %v157
    %v159 = vmul.f32 %v146, 1.442695
    %v160 = vpow.pop %v159
    %v161 = vmul.f32 %v147, 1.442695
    %v162 = vpow.pop %v161
    %v163 = vmul.f32 %v148, 1.442695
    %v164 = vpow.pop %v163
    %173 = vset.pattern.permute.xlu0 0
    %174 = vperm.xlu0 %173, %v150
    %v175 = vpop.permute.xlu0 %174
    %176 = vset.pattern.permute.xlu0 0
    %177 = vperm.xlu0 %176, %v152
    %v178 = vpop.permute.xlu0 %177
    %179 = vset.pattern.permute.xlu0 0
    %180 = vperm.xlu0 %179, %v154
    %v181 = vpop.permute.xlu0 %180
    %182 = vset.pattern.permute.xlu0 0
    %183 = vperm.xlu0 %182, %v156
    %v184 = vpop.permute.xlu0 %183
    %185 = vset.pattern.permute.xlu0 0
    %186 = vperm.xlu0 %185, %v158
    %v187 = vpop.permute.xlu0 %186
    %188 = vset.pattern.permute.xlu0 0
    %189 = vperm.xlu0 %188, %v160
    %v190 = vpop.permute.xlu0 %189
    %191 = vset.pattern.permute.xlu0 0
    %192 = vperm.xlu0 %191, %v162
    %v193 = vpop.permute.xlu0 %192
    %194 = vset.pattern.permute.xlu0 0
    %195 = vperm.xlu0 %194, %v164
    %v196 = vpop.permute.xlu0 %195
    %v197 = vperm.slane %v175, %v96
    %v198 = vperm.slane %v178, %v96
    %v199 = vperm.slane %v181, %v96
    %v200 = vperm.slane %v184, %v96
    %v201 = vperm.slane %v187, %v96
    %v202 = vperm.slane %v190, %v96
    %v203 = vperm.slane %v193, %v96
    %v204 = vperm.slane %v196, %v96
    %v205 = vsel %vm105, %v198, %v197
    %v206 = vsel %vm107, %v199, %v205
    %v207 = vsel %vm109, %v200, %v206
    %v208 = vsel %vm111, %v201, %v207
    %v209 = vsel %vm113, %v202, %v208
    %v210 = vsel %vm115, %v203, %v209
    %v211 = vsel %vm117, %v204, %v210
    %v213 = vsel %vm120, %v211, 0.0
    %214 = vadd.xlane.f32.xlu0 %v213
    %v215 = vpop.xlane.xlu0 %214
    %v217 = vperm.slane %v215, 0
    %v218 = vperm.slane %v215, 1
    %v219 = vperm.slane %v215, 2
    %v220 = vperm.slane %v215, 3
    %v221 = vperm.slane %v215, 4
    %v222 = vperm.slane %v215, 5
    %v223 = vperm.slane %v215, 6
    %v224 = vperm.slane %v215, 7
    %v233 = vrcp.pop %v217
    %v234 = vmul.f32 %v217, %v233
    %v235 = vsub.f32 1.0, %v234
    %v236 = vmul.f32 %v233, %v235
    %v237 = vadd.f32 %v233, %v236
    %vm238 = vweird.f32 %v217
    %vm239 = vweird.f32 %v233
    %vm240 = vmor %vm238, %vm239
    %v241 = vsel %vm240, %v233, %v237
    %v242 = vand.u32 2147483647, %v217
    %vm243 = vcmp.eq.f32.partialorder %v242, 8.507059e+37
    %v244 = vand.u32 %v217, 2147483648
    %v245 = vor.u32 1.1754944e-38, %v244
    %v246 = vsel %vm243, %v245, %v241
    %v247 = vmul.f32 %v150, %v246
    %v248 = vrcp.pop %v218
    %v249 = vmul.f32 %v218, %v248
    %v250 = vsub.f32 1.0, %v249
    %v251 = vmul.f32 %v248, %v250
    %v252 = vadd.f32 %v248, %v251
    %vm253 = vweird.f32 %v218
    %vm254 = vweird.f32 %v248
    %vm255 = vmor %vm253, %vm254
    %v256 = vsel %vm255, %v248, %v252
    %v257 = vand.u32 2147483647, %v218
    %vm258 = vcmp.eq.f32.partialorder %v257, 8.507059e+37
    %v259 = vand.u32 %v218, 2147483648
    %v260 = vor.u32 1.1754944e-38, %v259
    %v261 = vsel %vm258, %v260, %v256
    %v262 = vmul.f32 %v152, %v261
    %v263 = vrcp.pop %v219
    %v264 = vmul.f32 %v219, %v263
    %v265 = vsub.f32 1.0, %v264
    %v266 = vmul.f32 %v263, %v265
    %v267 = vadd.f32 %v263, %v266
    %vm268 = vweird.f32 %v219
    %vm269 = vweird.f32 %v263
    %vm270 = vmor %vm268, %vm269
    %v271 = vsel %vm270, %v263, %v267
    %v272 = vand.u32 2147483647, %v219
    %vm273 = vcmp.eq.f32.partialorder %v272, 8.507059e+37
    %v274 = vand.u32 %v219, 2147483648
    %v275 = vor.u32 1.1754944e-38, %v274
    %v276 = vsel %vm273, %v275, %v271
    %v277 = vmul.f32 %v154, %v276
    %v278 = vrcp.pop %v220
    %v279 = vmul.f32 %v220, %v278
    %v280 = vsub.f32 1.0, %v279
    %v281 = vmul.f32 %v278, %v280
    %v282 = vadd.f32 %v278, %v281
    %vm283 = vweird.f32 %v220
    %vm284 = vweird.f32 %v278
    %vm285 = vmor %vm283, %vm284
    %v286 = vsel %vm285, %v278, %v282
    %v287 = vand.u32 2147483647, %v220
    %vm288 = vcmp.eq.f32.partialorder %v287, 8.507059e+37
    %v289 = vand.u32 %v220, 2147483648
    %v290 = vor.u32 1.1754944e-38, %v289
    %v291 = vsel %vm288, %v290, %v286
    %v292 = vmul.f32 %v156, %v291
    %v293 = vrcp.pop %v221
    %v294 = vmul.f32 %v221, %v293
    %v295 = vsub.f32 1.0, %v294
    %v296 = vmul.f32 %v293, %v295
    %v297 = vadd.f32 %v293, %v296
    %vm298 = vweird.f32 %v221
    %vm299 = vweird.f32 %v293
    %vm300 = vmor %vm298, %vm299
    %v301 = vsel %vm300, %v293, %v297
    %v302 = vand.u32 2147483647, %v221
    %vm303 = vcmp.eq.f32.partialorder %v302, 8.507059e+37
    %v304 = vand.u32 %v221, 2147483648
    %v305 = vor.u32 1.1754944e-38, %v304
    %v306 = vsel %vm303, %v305, %v301
    %v307 = vmul.f32 %v158, %v306
    %v308 = vrcp.pop %v222
    %v309 = vmul.f32 %v222, %v308
    %v310 = vsub.f32 1.0, %v309
    %v311 = vmul.f32 %v308, %v310
    %v312 = vadd.f32 %v308, %v311
    %vm313 = vweird.f32 %v222
    %vm314 = vweird.f32 %v308
    %vm315 = vmor %vm313, %vm314
    %v316 = vsel %vm315, %v308, %v312
    %v317 = vand.u32 2147483647, %v222
    %vm318 = vcmp.eq.f32.partialorder %v317, 8.507059e+37
    %v319 = vand.u32 %v222, 2147483648
    %v320 = vor.u32 1.1754944e-38, %v319
    %v321 = vsel %vm318, %v320, %v316
    %v322 = vmul.f32 %v160, %v321
    %v323 = vrcp.pop %v223
    %v324 = vmul.f32 %v223, %v323
    %v325 = vsub.f32 1.0, %v324
    %v326 = vmul.f32 %v323, %v325
    %v327 = vadd.f32 %v323, %v326
    %vm328 = vweird.f32 %v223
    %vm329 = vweird.f32 %v323
    %vm330 = vmor %vm328, %vm329
    %v331 = vsel %vm330, %v323, %v327
    %v332 = vand.u32 2147483647, %v223
    %vm333 = vcmp.eq.f32.partialorder %v332, 8.507059e+37
    %v334 = vand.u32 %v223, 2147483648
    %v335 = vor.u32 1.1754944e-38, %v334
    %v336 = vsel %vm333, %v335, %v331
    %v337 = vmul.f32 %v162, %v336
    %v338 = vrcp.pop %v224
    %v339 = vmul.f32 %v224, %v338
    %v340 = vsub.f32 1.0, %v339
    %v341 = vmul.f32 %v338, %v340
    %v342 = vadd.f32 %v338, %v341
    %vm343 = vweird.f32 %v224
    %vm344 = vweird.f32 %v338
    %vm345 = vmor %vm343, %vm344
    %v346 = vsel %vm345, %v338, %v342
    %v347 = vand.u32 2147483647, %v224
    %vm348 = vcmp.eq.f32.partialorder %v347, 8.507059e+37
    %v349 = vand.u32 %v224, 2147483648
    %v350 = vor.u32 1.1754944e-38, %v349
    %v351 = vsel %vm348, %v350, %v346
    %v352 = vmul.f32 %v164, %v351
    %354 = vset.pattern.permute.xlu0 0
    %355 = vperm.xlu0 %354, %v247
    %v356 = vpop.permute.xlu0 %355
    %359 = vset.pattern.permute.xlu0 0
    %360 = vperm.xlu0 %359, %v262
    %v361 = vpop.permute.xlu0 %360
    %364 = vset.pattern.permute.xlu0 0
    %365 = vperm.xlu0 %364, %v277
    %v366 = vpop.permute.xlu0 %365
    %369 = vset.pattern.permute.xlu0 0
    %370 = vperm.xlu0 %369, %v292
    %v371 = vpop.permute.xlu0 %370
    %374 = vset.pattern.permute.xlu0 0
    %375 = vperm.xlu0 %374, %v307
    %v376 = vpop.permute.xlu0 %375
    %379 = vset.pattern.permute.xlu0 0
    %380 = vperm.xlu0 %379, %v322
    %v381 = vpop.permute.xlu0 %380
    %384 = vset.pattern.permute.xlu0 0
    %385 = vperm.xlu0 %384, %v337
    %v386 = vpop.permute.xlu0 %385
    %389 = vset.pattern.permute.xlu0 0
    %390 = vperm.xlu0 %389, %v352
    %v391 = vpop.permute.xlu0 %390
    %v393 = vmul.f32 %v356, %v42
    %v394 = vmul.f32 %v361, %v43
    %v395 = vmul.f32 %v366, %v44
    %v396 = vmul.f32 %v371, %v45
    %v397 = vmul.f32 %v376, %v46
    %v398 = vmul.f32 %v381, %v47
    %v399 = vmul.f32 %v386, %v48
    %v400 = vmul.f32 %v391, %v49
    %v401 = vsel %vm62, %v393, 0.0
    %v402 = vrot.slane %v401, 4
    %v403 = vadd.f32 %v401, %v402
    %v404 = vrot.slane %v403, 2
    %v405 = vadd.f32 %v403, %v404
    %v406 = vrot.slane %v405, 1
    %v407 = vadd.f32 %v405, %v406
    %v408 = vsel %vm62, %v394, 0.0
    %v409 = vrot.slane %v408, 4
    %v410 = vadd.f32 %v408, %v409
    %v411 = vrot.slane %v410, 2
    %v412 = vadd.f32 %v410, %v411
    %v413 = vrot.slane %v412, 1
    %v414 = vadd.f32 %v412, %v413
    %v415 = vsel %vm62, %v395, 0.0
    %v416 = vrot.slane %v415, 4
    %v417 = vadd.f32 %v415, %v416
    %v418 = vrot.slane %v417, 2
    %v419 = vadd.f32 %v417, %v418
    %v420 = vrot.slane %v419, 1
    %v421 = vadd.f32 %v419, %v420
    %v422 = vsel %vm62, %v396, 0.0
    %v423 = vrot.slane %v422, 4
    %v424 = vadd.f32 %v422, %v423
    %v425 = vrot.slane %v424, 2
    %v426 = vadd.f32 %v424, %v425
    %v427 = vrot.slane %v426, 1
    %v428 = vadd.f32 %v426, %v427
    %v429 = vsel %vm62, %v397, 0.0
    %v430 = vrot.slane %v429, 4
    %v431 = vadd.f32 %v429, %v430
    %v432 = vrot.slane %v431, 2
    %v433 = vadd.f32 %v431, %v432
    %v434 = vrot.slane %v433, 1
    %v435 = vadd.f32 %v433, %v434
    %v436 = vsel %vm62, %v398, 0.0
    %v437 = vrot.slane %v436, 4
    %v438 = vadd.f32 %v436, %v437
    %v439 = vrot.slane %v438, 2
    %v440 = vadd.f32 %v438, %v439
    %v441 = vrot.slane %v440, 1
    %v442 = vadd.f32 %v440, %v441
    %v443 = vsel %vm62, %v399, 0.0
    %v444 = vrot.slane %v443, 4
    %v445 = vadd.f32 %v443, %v444
    %v446 = vrot.slane %v445, 2
    %v447 = vadd.f32 %v445, %v446
    %v448 = vrot.slane %v447, 1
    %v449 = vadd.f32 %v447, %v448
    %v450 = vsel %vm62, %v400, 0.0
    %v451 = vrot.slane %v450, 4
    %v452 = vadd.f32 %v450, %v451
    %v453 = vrot.slane %v452, 2
    %v454 = vadd.f32 %v452, %v453
    %v455 = vrot.slane %v454, 1
    %v456 = vadd.f32 %v454, %v455
    %v465 = vsel %vm105, %v414, %v407
    %v466 = vsel %vm107, %v421, %v465
    %v467 = vsel %vm109, %v428, %v466
    %v468 = vsel %vm111, %v435, %v467
    %v469 = vsel %vm113, %v442, %v468
    %v470 = vsel %vm115, %v449, %v469
    %v471 = vsel %vm117, %v456, %v470
    %473 = vst.msk [vmem:[#allocation7] sm:$0xff] %vm62, %v471
    // Predicated region
    $region18: #{tpu_custom_call.1} parent=1 // pred_check
      _
    $region19: #{tpu_custom_call.1} parent=1 // pred_check_branch
      %475 = sbr.rel (0) target = $region21
    $region20: #{tpu_custom_call.1} parent=1 // pred_region
      %477 = vsyncadd [#allocation4], 0
      %s479 = sshll.u32 [#allocation7], 4
      %s480 = int_to_ptr.vmem [resolvable:$true] %s479
      %s481 = sshll.u32 %s2, 4
      %s482 = int_to_ptr.hbm [resolvable:$true] %s481
      %484 = dma.vmem_to_hbm [thread:$0]  %s480, 128, %s482, [#allocation4]
    $region21: #{tpu_custom_call.1} parent=1 // pred_fallthru
      _
    // Predicated region
    $region22: #{tpu_custom_call.1} parent=1 // pred_check
      _
    $region23: #{tpu_custom_call.1} parent=1 // pred_check_branch
      %486 = sbr.rel (0) target = $region25
    $region24: #{tpu_custom_call.1} parent=1 // pred_region
      %488 = dma.done [#allocation4], 128
    $region25: #{tpu_custom_call.1} parent=1 // pred_fallthru
      _
    %489 = vsyncpa [#allocation3], 1
    %490 = vsyncpa [#allocation6], 1
    %491 = vsyncpa [#allocation4], 1

</llo_original>
